<compile_context>
chip_gen: v7x
topology: tpu7x:2x2x1
jax: 0.10.0
libtpu: 0.0.40
codegen_flags: <defaults>
</compile_context>

<pallas_src>
import functools
import math

import jax
import jax.numpy as jnp
from jax.experimental import pallas as pl
from jax.experimental.pallas import tpu as pltpu


def _quant_relu_kernel(x_ref, mask_ref, o_ref, *, lower, upper, delta,
                       inv_delta, base):
    # x_ref: (tile_rows, tile_lanes) block of the flattened 2-D input.
    # mask_ref: (1, tile_lanes) boundary-mask row, broadcast over the rows.
    x = x_ref[...]
    m = mask_ref[...]

    # quantized branch: round((hardtanh(x, lower, upper) - lower) / delta) * delta
    # fused clip/shift + reciprocal-multiply (no f32 divide):
    q = jnp.round(jnp.maximum(jnp.minimum(x, upper) - lower, 0.0) * inv_delta) * delta
    # pass-through branch: relu(x) (+ the constant the quantized branch takes
    # at x == 0; exactly 0.0 for the default lower/upper bounds).
    r = jnp.maximum(x, 0.0)
    if base != 0.0:
        r = r + base

    # compare on the small (1, tile_lanes) row; the select broadcasts it.
    o_ref[...] = jnp.where(m != 0.0, q, r)


def gen_mask(H, W, pieces=(2, 2)):
    """JAX equivalent of the module's gen_mask (depends only on H, W)."""
    mask = jnp.zeros((H, W), jnp.float32)
    for i in range(1, pieces[0]):
        mask = mask.at[i * H // pieces[0] - 1, :].set(1.0)
        mask = mask.at[i * H // pieces[0], :].set(1.0)
    for j in range(1, pieces[1]):
        mask = mask.at[:, j * W // pieces[1] - 1].set(1.0)
        mask = mask.at[:, j * W // pieces[1]].set(1.0)
    return mask


def _pick_tiles(rows_total, lane_total, target_tile_bytes=4 << 20):
    """Choose (tile_rows, tile_lanes) for the flattened (rows, lanes) view."""
    elem = 4  # float32
    # Lane tiling: keep the full lane width unless an 8-row slab already blows
    # the target; otherwise use a multiple-of-128 lane block near the target.
    if lane_total * elem * 8 <= target_tile_bytes:
        tile_lanes = lane_total
    else:
        tile_lanes = max(128, (target_tile_bytes // (8 * elem)) // 128 * 128)
        tile_lanes = min(tile_lanes, lane_total)
    # Row tiling: fill the ~4 MiB budget, sublane-aligned (multiple of 8).
    tile_rows = max(8, (target_tile_bytes // (tile_lanes * elem)) // 8 * 8)
    tile_rows = min(tile_rows, rows_total)

    lane_blocks = math.ceil(lane_total / tile_lanes)
    row_blocks = math.ceil(rows_total / tile_rows)
    # Prefer an even total grid-step count so the parallel axes split evenly
    # across v7x's two TensorCores (no-op on single-TC v5e/v6e).
    if (lane_blocks * row_blocks) % 2 == 1:
        if rows_total > 8:
            want = row_blocks + 1
            cand = ((math.ceil(rows_total / want) + 7) // 8) * 8
            if 8 <= cand < rows_total and math.ceil(rows_total / cand) % 2 == 0:
                tile_rows = cand
        elif (lane_blocks == 1 and lane_total % 256 == 0
              and lane_total // 2 >= 512):
            tile_lanes = lane_total // 2
    return tile_rows, tile_lanes


def quant_relu(x, lower_bound=0.8, upper_bound=1.0, num_bits=4.0,
               num_pieces=(2, 2), tile_rows=None, tile_lanes=None):
    """x: (N, C, H, W) float32 -> (N, C, H, W) float32."""
    N, C, H, W = x.shape
    HW = H * W
    delta = float((upper_bound - lower_bound) / (2.0 ** num_bits - 1.0))
    inv_delta = 1.0 / delta

    mask_hw = gen_mask(H, W, num_pieces).reshape(-1)

    # Lane-dense 2-D layout:
    #  * HW % 128 == 0 -> (N*C, HW) rows with a single (1, HW) mask row.
    #  * otherwise     -> fold channels into the lane axis: (N, C*HW), mask
    #    replicated C times (unmasked full-lane stores for 56/28/14 maps).
    if HW % 128 == 0:
        rows_total, lane_total = N * C, HW
        mask_row = mask_hw.reshape(1, HW)
    else:
        rows_total, lane_total = N, C * HW
        mask_row = jnp.tile(mask_hw, C).reshape(1, C * HW)
    x_flat = x.reshape(rows_total, lane_total)

    auto_rows, auto_lanes = _pick_tiles(rows_total, lane_total)
    if tile_rows is None:
        tile_rows = auto_rows
    if tile_lanes is None:
        tile_lanes = auto_lanes

    grid = (pl.cdiv(lane_total, tile_lanes), pl.cdiv(rows_total, tile_rows))

    # Value the quantized branch produces where mask == 0 (x*mask == 0).
    # Computed with the same fused/reciprocal math as the kernel; it is exactly
    # 0.0 for the default parameters (lower_bound > 0).
    z = max(min(0.0, float(upper_bound)) - float(lower_bound), 0.0) * inv_delta
    base = float(round(z)) * delta

    kernel = functools.partial(
        _quant_relu_kernel,
        lower=float(lower_bound), upper=float(upper_bound),
        delta=delta, inv_delta=inv_delta, base=base)

    out_flat = pl.pallas_call(
        kernel,
        out_shape=jax.ShapeDtypeStruct((rows_total, lane_total), x.dtype),
        grid=grid,
        in_specs=[
            pl.BlockSpec((tile_rows, tile_lanes), lambda j, i: (i, j)),
            pl.BlockSpec((1, tile_lanes), lambda j, i: (0, j)),
        ],
        out_specs=pl.BlockSpec((tile_rows, tile_lanes), lambda j, i: (i, j)),
        compiler_params=pltpu.CompilerParams(
            dimension_semantics=("parallel", "parallel"),
            # 2x in + 2x out double-buffered ~4 MiB tiles + mask << 32 MiB;
            # above v5e's 16 MiB scoped default, safe under v7x's 64 MiB VMEM.
            vmem_limit_bytes=32 << 20,
        ),
    )(x_flat, mask_row)

    return out_flat.reshape(N, C, H, W)


def _reference(x, lower_bound=0.8, upper_bound=1.0, num_bits=4.0, num_pieces=(2, 2)):
    """Pure-JAX reference mirroring the PyTorch forward."""
    delta = (upper_bound - lower_bound) / (2.0 ** num_bits - 1.0)
    mask = gen_mask(x.shape[2], x.shape[3], num_pieces)[None, None, :, :]
    r1 = jnp.clip(x * mask, lower_bound, upper_bound) - lower_bound
    r1 = jnp.round(r1 / delta) * delta
    return jnp.maximum(x * (1.0 - mask), 0.0) + r1


if __name__ == "__main__":
    key = jax.random.PRNGKey(0)
    k1, k2, k3, k4 = jax.random.split(key, 4)

    # 1) Small shape matching the module (batch=2, channels=4, spatial=16).
    x1 = jax.random.normal(k1, (2, 4, 16, 16), dtype=jnp.float32) * 1.5
    o1 = jax.block_until_ready(quant_relu(x1))
    assert o1.shape == x1.shape
    assert jnp.allclose(o1, _reference(x1), atol=1e-5, rtol=1e-5), "mismatch (base)"

    # 2) Multi-row-block grid with a partial final block (20 rows -> 16 + 4).
    x2 = jax.random.normal(k2, (4, 5, 16, 16), dtype=jnp.float32) * 1.5
    o2 = jax.block_until_ready(quant_relu(x2))
    assert jnp.allclose(o2, _reference(x2), atol=1e-5, rtol=1e-5), "mismatch (row-tiled)"

    # 3) H*W not a multiple of 128 -> channel-folded lane layout (N, C*H*W).
    x3 = jax.random.normal(k3, (2, 4, 10, 12), dtype=jnp.float32) * 1.5
    o3 = jax.block_until_ready(quant_relu(x3))
    assert jnp.allclose(o3, _reference(x3), atol=1e-5, rtol=1e-5), "mismatch (folded-C)"

    # 4) Explicit lane tiling (two 128-wide lane blocks) to exercise the
    #    lane-blocked mask index_map path.
    x4 = jax.random.normal(k4, (2, 4, 16, 16), dtype=jnp.float32) * 1.5
    o4 = jax.block_until_ready(quant_relu(x4, tile_lanes=128))
    assert jnp.allclose(o4, _reference(x4), atol=1e-5, rtol=1e-5), "mismatch (lane-tiled)"

    print("KERNEL_OK")
</pallas_src>

<mosaic_0001>
module attributes {stable_mosaic.version = 11 : i64} {
  func.func @_quant_relu_kernel(%arg0: i32, %arg1: i32, %arg2: memref<8x256xf32, #tpu.memory_space<vmem>>, %arg3: memref<1x256xf32, #tpu.memory_space<vmem>>, %arg4: memref<8x256xf32, #tpu.memory_space<vmem>>) attributes {dimension_semantics = [#tpu.dimension_semantics<parallel>, #tpu.dimension_semantics<parallel>], iteration_bounds = array<i64: 1, 1>, scalar_prefetch = 0 : i64, scratch_operands = 0 : i64, tpu.core_type = #tpu.core_type<tc>, window_params = [{transform_indices = @transform_0, window_bounds = array<i64: 8, 256>}, {transform_indices = @transform_1, window_bounds = array<i64: 1, 256>}, {transform_indices = @transform_2, window_bounds = array<i64: 8, 256>}]} {
    %c0 = arith.constant 0 : index
    %c0_0 = arith.constant 0 : index
    %0 = vector.load %arg2[%c0, %c0_0] : memref<8x256xf32, #tpu.memory_space<vmem>>, vector<8x256xf32>
    %c0_1 = arith.constant 0 : index
    %c0_2 = arith.constant 0 : index
    %1 = vector.load %arg3[%c0_1, %c0_2] : memref<1x256xf32, #tpu.memory_space<vmem>>, vector<1x256xf32>
    %cst = arith.constant 1.000000e+00 : f32
    %2 = vector.broadcast %cst : f32 to vector<8x256xf32>
    %3 = arith.minimumf %0, %2 : vector<8x256xf32>
    %cst_3 = arith.constant 8.000000e-01 : f32
    %4 = vector.broadcast %cst_3 : f32 to vector<8x256xf32>
    %5 = arith.subf %3, %4 : vector<8x256xf32>
    %cst_4 = arith.constant 0.000000e+00 : f32
    %6 = vector.broadcast %cst_4 : f32 to vector<8x256xf32>
    %7 = arith.maximumf %5, %6 : vector<8x256xf32>
    %cst_5 = arith.constant 7.500000e+01 : f32
    %8 = vector.broadcast %cst_5 : f32 to vector<8x256xf32>
    %9 = arith.mulf %7, %8 : vector<8x256xf32>
    %10 = math.roundeven %9 : vector<8x256xf32>
    %cst_6 = arith.constant 0.0133333337 : f32
    %11 = vector.broadcast %cst_6 : f32 to vector<8x256xf32>
    %12 = arith.mulf %10, %11 : vector<8x256xf32>
    %cst_7 = arith.constant 0.000000e+00 : f32
    %13 = vector.broadcast %cst_7 : f32 to vector<8x256xf32>
    %14 = arith.maximumf %0, %13 : vector<8x256xf32>
    %cst_8 = arith.constant 0.000000e+00 : f32
    %15 = vector.broadcast %cst_8 : f32 to vector<1x256xf32>
    %16 = arith.cmpf one, %1, %15 : vector<1x256xf32>
    %17 = vector.shape_cast %16 : vector<1x256xi1> to vector<1x256xi1>
    %18 = vector.broadcast %17 : vector<1x256xi1> to vector<8x256xi1>
    %19 = arith.select %18, %12, %14 : vector<8x256xi1>, vector<8x256xf32>
    %c0_9 = arith.constant 0 : index
    %c0_10 = arith.constant 0 : index
    %20 = vector.load %arg4[%c0_9, %c0_10] : memref<8x256xf32, #tpu.memory_space<vmem>>, vector<8x256xf32>
    tpu.vector_store %arg4[%c0_9, %c0_10], %19 {strides = array<i32>} : memref<8x256xf32, #tpu.memory_space<vmem>>, vector<8x256xf32>,
    return
  }
  func.func @transform_0(%arg0: i32, %arg1: i32) -> (i32, i32) {
    %c0_i32 = arith.constant 0 : i32
    return %arg1, %arg0 : i32, i32
  }
  func.func @transform_1(%arg0: i32, %arg1: i32) -> (i32, i32) {
    %c0_i32 = arith.constant 0 : i32
    %c0_i32_0 = arith.constant 0 : i32
    return %c0_i32, %arg0 : i32, i32
  }
  func.func @transform_2(%arg0: i32, %arg1: i32) -> (i32, i32) {
    %c0_i32 = arith.constant 0 : i32
    return %arg1, %arg0 : i32, i32
  }
}

</mosaic_0001>

<llo_original>
// kernel: tpu_custom_call.1
$region0: #{tpu_custom_call.1}
  #allocation0 [shape = 'u32[]', space=smem, size = 0x4, offset = 0x4, fixed_abs, tag = 'smem constant byte address 0x4 - core index']
  #allocation1 [shape = 'u32[144,128]{1,0:T(1,128)}', space=vmem, size = 0x12000, scoped, tag = 'internal scratch']
  %s0 = inlined_call_operand.hbm [shape: f32[8,256], index: 0, kind: input, shape index: {}]
  %s1 = inlined_call_operand.vmem [shape: f32[1,256], index: 1, kind: input, shape index: {}]
  %s2 = inlined_call_operand.hbm [shape: f32[8,256], index: 2, kind: output, shape index: {}]
  %s3 = sld [smem:[#allocation0]]
  $region22: #{tpu_custom_call.1} parent=0
    _
  %s5 = ssub.s32 1, %s3
  %s6 = scalar_select 0, %s5, %s3
  $region1: #{tpu_custom_call.1} parent=0
    #allocation2 [shape = 'u8[8192]{0}', space=vmem, size = 0x2000, scoped, tag = 'input window, operand 0, single buffered']
    #allocation3 [shape = 's32[1]{0}', space=sflag, size = 0x4, scoped, tag = 'scoped memory for tpu_custom_call.1']
    #allocation4 [shape = 's32[1]{0}', space=sflag, size = 0x4, scoped, tag = 'scoped memory for tpu_custom_call.1']
    #allocation5 [shape = 'u8[8192]{0}', space=vmem, size = 0x2000, scoped, tag = 'output window, operand 0, single buffered']
    %7 = vsyncpa [#allocation3], 0
    %8 = vsyncpa [#allocation4], 0
    // Predicated region
    $region2: #{tpu_custom_call.1} parent=1 // pred_check
      _
    $region3: #{tpu_custom_call.1} parent=1 // pred_check_branch
      %10 = sbr.rel (0) target = $region5
    $region4: #{tpu_custom_call.1} parent=1 // pred_region
      %s12 = ssub.s32 256, 256
      %13 = vsyncadd [#allocation3], %s12
      %s15 = sshll.u32 [#allocation2], 4
      %s16 = int_to_ptr.vmem [resolvable:$true] %s15
      %18 = dma.hbm_to_vmem [thread:$0]  %s0, 256, %s16, [#allocation3]
    $region5: #{tpu_custom_call.1} parent=1 // pred_fallthru
      _
    // Predicated region
    $region6: #{tpu_custom_call.1} parent=1 // pred_check
      _
    $region7: #{tpu_custom_call.1} parent=1 // pred_check_branch
      %20 = sbr.rel (0) target = $region9
    $region8: #{tpu_custom_call.1} parent=1 // pred_region
      _
    $region9: #{tpu_custom_call.1} parent=1 // pred_fallthru
      _
    // Predicated region
    $region10: #{tpu_custom_call.1} parent=1 // pred_check
      _
    $region11: #{tpu_custom_call.1} parent=1 // pred_check_branch
      %22 = sbr.rel (0) target = $region13
    $region12: #{tpu_custom_call.1} parent=1 // pred_region
      %23 = dma.done [#allocation3], 256
    $region13: #{tpu_custom_call.1} parent=1 // pred_fallthru
      _
    %v24 = vld [vmem:[#allocation2] sm:$0xff]
    %v25 = vld [vmem:[#allocation2 + $0x8] sm:$0xff]
    %v26 = vld [vmem:[%s1] sm:$0x3]
    %v27 = vmin.f32 %v24, 1.0
    %v28 = vmin.f32 %v25, 1.0
    %v29 = vsub.f32 %v27, 0.8
    %v30 = vsub.f32 %v28, 0.8
    %v31 = vmax.f32 %v29, 0.0
    %v32 = vmax.f32 %v30, 0.0
    %v33 = vmul.f32 %v31, 75.0
    %v34 = vmul.f32 %v32, 75.0
    %v35 = vround.ne.pseudo %v33
    %v36 = vround.ne.pseudo %v34
    %v37 = vmul.f32 %v35, 0.013333334
    %v38 = vmul.f32 %v36, 0.013333334
    %v39 = vmax.f32 %v24, 0.0
    %v40 = vmax.f32 %v25, 0.0
    %vm41 = vcmp.ne.f32.partialorder %v26, 0.0
    %v42 = vsel %vm41, 1, 0
    %v43 = vlaneseq
    %v44 = vshrl.u32 %v43, 7
    %v45 = vsub.s32 0, %v44
    %v46 = vrot.slane %v42, %v45
    %v47 = vlaneseq
    %v48 = vshrl.u32 %v47, 7
    %v49 = vsub.s32 1, %v48
    %v50 = vrot.slane %v42, %v49
    %vm51 = vcmp.eq.s32.totalorder %v46, 1
    %vm52 = vcmp.eq.s32.totalorder %v50, 1
    %v53 = vsel %vm51, %v37, %v39
    %v54 = vsel %vm52, %v38, %v40
    %55 = vst [vmem:[#allocation5] sm:$0xff] %v53
    %56 = vst [vmem:[#allocation5 + $0x8] sm:$0xff] %v54
    // Predicated region
    $region14: #{tpu_custom_call.1} parent=1 // pred_check
      _
    $region15: #{tpu_custom_call.1} parent=1 // pred_check_branch
      %58 = sbr.rel (0) target = $region17
    $region16: #{tpu_custom_call.1} parent=1 // pred_region
      %s60 = ssub.s32 256, 256
      %61 = vsyncadd [#allocation4], %s60
      %s63 = sshll.u32 [#allocation5], 4
      %s64 = int_to_ptr.vmem [resolvable:$true] %s63
      %66 = dma.vmem_to_hbm [thread:$0]  %s64, 256, %s2, [#allocation4]
    $region17: #{tpu_custom_call.1} parent=1 // pred_fallthru
      _
    // Predicated region
    $region18: #{tpu_custom_call.1} parent=1 // pred_check
      _
    $region19: #{tpu_custom_call.1} parent=1 // pred_check_branch
      %68 = sbr.rel (0) target = $region21
    $region20: #{tpu_custom_call.1} parent=1 // pred_region
      %69 = dma.done [#allocation4], 256
    $region21: #{tpu_custom_call.1} parent=1 // pred_fallthru
      _
    %70 = vsyncpa [#allocation3], 1
    %71 = vsyncpa [#allocation4], 1

</llo_original>
